<compile_context>
chip_gen: v7x
topology: tpu7x:2x2x1
jax: 0.10.0
libtpu: 0.0.40
codegen_flags: <defaults>
</compile_context>

<pallas_src>
from functools import partial

import jax
import jax.numpy as jnp
from jax.experimental import pallas as pl
from jax.experimental.pallas import tpu as pltpu

_MIB = 1024 * 1024


# --------------------------------------------------------------------------
# Kernels
# --------------------------------------------------------------------------

def _apply_nl(t, nl):
    # Keep nonlinearity math in f32 (no bf16 VPU/EUP on v5e).
    if nl is None:
        return t
    if nl == "tanh":
        return jnp.tanh(t)
    if nl == "relu":
        return jnp.maximum(t, 0.0)
    if nl == "sigmoid":
        return jax.nn.sigmoid(t)
    raise ValueError(f"unsupported nl: {nl!r}")


def _fused_kernel(x_ref, w_ref, o_ref):
    # x_ref: (bt, cin) bf16   w_ref: (cin, cout) bf16 (resident)   o_ref: (bt, cout) f32
    # One lane-dense MXU matmul; f32 accumulation.
    o_ref[...] = jnp.dot(x_ref[...], w_ref[...], preferred_element_type=jnp.float32)


def _expanded_kernel(x_ref, w1_ref, w2_ref, o_ref, *, nl):
    # x_ref : (bt, cin)  bf16
    # w1_ref: (cin, cmid) bf16, columns ordered (j, k, w)        [resident]
    # w2_ref: (cmid, cout) bf16, rows (j,k,w), cols (o, k, m)    [resident]
    # o_ref : (bt, cout) f32, columns (o, k, m) == NCHW-flat output
    t1 = jnp.dot(x_ref[...], w1_ref[...], preferred_element_type=jnp.float32)
    t1 = _apply_nl(t1, nl)                                   # elementwise, f32
    o_ref[...] = jnp.dot(t1.astype(w2_ref.dtype), w2_ref[...],
                         preferred_element_type=jnp.float32)


def _factored_kernel(x_ref, w1_ref, w2_ref, o_ref, *, bt, nch_int, nrow, nl):
    # Factored fallback (only used when the composed/expanded operators do not fit VMEM,
    # i.e. nrow*ncol is large, where each per-item dot is already MXU-sized).
    # x_ref : (bt, nch_in*nrow, ncol)          bf16
    # w1_ref: (nch_int*nrow, nch_in*nrow)      bf16, rows (j, k)
    # w2_ref: (nch_int, ncol, nch_out*ncol)    bf16, [j, w, (o, m)]
    # o_ref : (bt, nrow, nch_out*ncol)         f32,  [b, k, (o, m)]
    w1 = w1_ref[...]
    w2 = w2_ref[...]
    for b in range(bt):                        # bt <= 8: bounded static unroll
        t1 = jnp.dot(w1, x_ref[b], preferred_element_type=jnp.float32)   # (J*K, ncol)
        t1 = _apply_nl(t1, nl).astype(w2.dtype)
        # mid-permute handled by sublane-aligned slices + accumulation over the
        # (tiny) intermediate-channel axis -- no concatenate.
        y = jnp.dot(t1[0:nrow, :], w2[0], preferred_element_type=jnp.float32)
        for j in range(1, nch_int):
            y = y + jnp.dot(t1[j * nrow:(j + 1) * nrow, :], w2[j],
                            preferred_element_type=jnp.float32)
        o_ref[b] = y


# --------------------------------------------------------------------------
# Tiling helpers
# --------------------------------------------------------------------------

def _vmem_limit_bytes():
    """Scoped-VMEM limit: physical minus headroom, clamped to a range safe on v5e/v6e/v7x."""
    try:
        phys = int(pltpu.get_tpu_info().vmem_capacity_bytes)
    except Exception:
        phys = 64 * _MIB                      # conservative: v7x physical per-core size
    return int(min(max(phys - 16 * _MIB, 32 * _MIB), 100 * _MIB))


def _pick_batch_tile(batch, cap):
    """Largest divisor of `batch` that is <= cap (never exceeds the VMEM-derived cap).

    Prefers tiles that are a full sublane multiple (x8) or equal to the full batch so
    BlockSpec shapes stay trivially legal/unpadded."""
    cap = max(1, min(int(cap), batch))
    best, best_safe = 1, None
    for d in range(1, cap + 1):
        if batch % d == 0:
            best = d
            if d % 8 == 0 or d == batch:
                best_safe = d
    return best_safe if best_safe is not None else best


# --------------------------------------------------------------------------
# Layer wrapper (weight operators precomputed once at construction)
# --------------------------------------------------------------------------

class GeneralisedIFT2:
    """Pallas-TPU forward for GeneralisedIFT2Layer (kernel_size=1, bias/bn disabled).

    w1: [nch_int*nrow, nch_in, nrow]   (idft1.weight with trailing kernel dim squeezed)
    w2: [nch_out*ncol, nch_int, ncol]  (idft2.weight with trailing kernel dim squeezed)
    """

    def __init__(self, w1, w2, *, nl=None, compute_dtype=jnp.bfloat16,
                 composed=None, batch_tile=None, vmem_limit_bytes=None):
        w1 = jnp.asarray(w1, jnp.float32)
        w2 = jnp.asarray(w2, jnp.float32)
        self.nch_in = int(w1.shape[1])
        self.nrow = int(w1.shape[2])
        self.nch_int = int(w1.shape[0]) // self.nrow
        self.ncol = int(w2.shape[2])
        self.nch_out = int(w2.shape[0]) // self.ncol
        assert int(w2.shape[1]) == self.nch_int, "w1/w2 intermediate channels mismatch"

        self.nl = nl
        self.compute_dtype = compute_dtype
        self.batch_tile = batch_tile
        self.vmem_limit = int(vmem_limit_bytes or _vmem_limit_bytes())

        cin = self.nch_in * self.nrow * self.ncol
        cmid = self.nch_int * self.nrow * self.ncol
        cout = self.nch_out * self.nrow * self.ncol
        self.cin, self.cmid, self.cout = cin, cmid, cout

        wb = jnp.dtype(compute_dtype).itemsize
        w_resident = (cin * cout * wb) if nl is None else (cin * cmid + cmid * cout) * wb
        if composed is None:
            # Gate: double-buffered resident weights must leave room for batch tiles,
            # and the ~nrow/2 FLOP inflation of the composed form must stay bounded.
            composed = (2 * w_resident <= self.vmem_limit // 2
                        and self.nrow * self.ncol <= 64 * 64)
        self.composed = bool(composed)

        w1r = w1.reshape(self.nch_int, self.nrow, self.nch_in, self.nrow)    # [j,k,c,n]
        w2r = w2.reshape(self.nch_out, self.ncol, self.nch_int, self.ncol)   # [o,m,j,w]

        if self.composed and nl is None:
            # Single composed operator: out[b,(o,k,m)] = x[b,(c,n,w)] @ W_total
            wt = jnp.einsum("omjw,jkcn->cnwokm", w2r, w1r).reshape(cin, cout)
            self.w_total = wt.astype(compute_dtype)
        elif self.composed:
            eye_w = jnp.eye(self.ncol, dtype=jnp.float32)
            eye_k = jnp.eye(self.nrow, dtype=jnp.float32)
            # Stage-1 operator expanded with an identity over the column axis,
            # columns ordered (j, k, w).
            w1big = jnp.einsum("jkcn,wv->cnwjkv", w1r, eye_w).reshape(cin, cmid)
            # Stage-2 operator with the mid-permute and the final permute folded into
            # its row / column orderings: rows (j,k,w), columns (o,k,m) -> the kernel
            # output is already NCHW-flat.
            w2big = jnp.einsum("omjw,kl->jkwolm", w2r, eye_k).reshape(cmid, cout)
            self.w1big = w1big.astype(compute_dtype)
            self.w2big = w2big.astype(compute_dtype)
        else:
            # Factored fallback weights.
            self.w1_flat = w1.reshape(self.nch_int * self.nrow,
                                      self.nch_in * self.nrow).astype(compute_dtype)
            # w2 as [j, w, (o,m)] so stage 2 is a slice + dot per intermediate channel.
            self.w2_jw = jnp.transpose(w2, (1, 2, 0)).astype(compute_dtype)

        fwd = self._forward_composed if self.composed else self._forward_factored
        self._forward = jax.jit(fwd)

    # ------------------------------------------------------------------ call
    def __call__(self, x):
        assert x.shape[1:] == (self.nch_in, self.nrow, self.ncol), "bad input shape"
        return self._forward(x)

    # ----------------------------------------------------- composed/expanded
    def _forward_composed(self, x):
        B = x.shape[0]
        cin, cmid, cout = self.cin, self.cmid, self.cout
        cdt = self.compute_dtype
        wb = jnp.dtype(cdt).itemsize

        x_flat = x.reshape(B, cin).astype(cdt)      # contiguous NCHW flatten + one cast

        # VMEM accounting: resident weights are double-buffered by the BlockSpec
        # pipeline even though their block index never changes, plus double-buffered
        # input (bf16) and output (f32) rows (+ the t1 intermediate for the nl path).
        if self.nl is None:
            w_resident = 2 * cin * cout * wb
            per_row = 2 * (cin * wb + cout * 4)
        else:
            w_resident = 2 * (cin * cmid + cmid * cout) * wb
            per_row = 2 * (cin * wb + cout * 4) + cmid * (4 + wb)
        budget = int(self.vmem_limit * 0.8) - w_resident
        cap = max(1, budget // max(1, per_row))
        if B >= 16:
            cap = min(cap, B // 2)   # >= 2 grid steps: both v7x TensorCores get work
        if self.batch_tile is not None:
            cap = min(cap, self.batch_tile)
        bt = _pick_batch_tile(B, cap)

        cp = pltpu.CompilerParams(dimension_semantics=("parallel",),
                                  vmem_limit_bytes=self.vmem_limit)

        if self.nl is None:
            grid_spec = pltpu.PrefetchScalarGridSpec(
                num_scalar_prefetch=0,
                grid=(B // bt,),
                in_specs=[pl.BlockSpec((bt, cin), lambda i: (i, 0)),
                          pl.BlockSpec((cin, cout), lambda i: (0, 0))],   # resident
                out_specs=pl.BlockSpec((bt, cout), lambda i: (i, 0)),
            )
            out_flat = pl.pallas_call(
                _fused_kernel,
                out_shape=jax.ShapeDtypeStruct((B, cout), jnp.float32),
                grid_spec=grid_spec,
                compiler_params=cp,
            )(x_flat, self.w_total)
        else:
            grid_spec = pltpu.PrefetchScalarGridSpec(
                num_scalar_prefetch=0,
                grid=(B // bt,),
                in_specs=[pl.BlockSpec((bt, cin), lambda i: (i, 0)),
                          pl.BlockSpec((cin, cmid), lambda i: (0, 0)),    # resident
                          pl.BlockSpec((cmid, cout), lambda i: (0, 0))],  # resident
                out_specs=pl.BlockSpec((bt, cout), lambda i: (i, 0)),
            )
            out_flat = pl.pallas_call(
                partial(_expanded_kernel, nl=self.nl),
                out_shape=jax.ShapeDtypeStruct((B, cout), jnp.float32),
                grid_spec=grid_spec,
                compiler_params=cp,
            )(x_flat, self.w1big, self.w2big)

        # Output columns are already (o, k, m): NCHW reshape is metadata-only.
        return out_flat.reshape(B, self.nch_out, self.nrow, self.ncol)

    # --------------------------------------------------------------- factored
    def _forward_factored(self, x):
        B = x.shape[0]
        CN = self.nch_in * self.nrow
        JK = self.nch_int * self.nrow
        W = self.ncol
        OM = self.nch_out * self.ncol
        K = self.nrow

        x3 = x.reshape(B, CN, W).astype(self.compute_dtype)

        # Small, statically-unrolled batch tile: in the regime where this path is used
        # (large nrow*ncol) each per-item dot is already MXU-sized, and a small bt keeps
        # unroll / vreg pressure bounded.
        cap = 8
        if B >= 16:
            cap = min(cap, B // 2)
        if self.batch_tile is not None:
            cap = min(cap, self.batch_tile)
        bt = _pick_batch_tile(B, cap)

        y = pl.pallas_call(
            partial(_factored_kernel, bt=bt, nch_int=self.nch_int, nrow=K, nl=self.nl),
            out_shape=jax.ShapeDtypeStruct((B, K, OM), jnp.float32),
            grid_spec=pltpu.PrefetchScalarGridSpec(
                num_scalar_prefetch=0,
                grid=(B // bt,),
                in_specs=[pl.BlockSpec((bt, CN, W), lambda i: (i, 0, 0)),
                          pl.BlockSpec((JK, CN), lambda i: (0, 0)),
                          pl.BlockSpec((self.nch_int, W, OM), lambda i: (0, 0, 0))],
                out_specs=pl.BlockSpec((bt, K, OM), lambda i: (i, 0, 0)),
            ),
            compiler_params=pltpu.CompilerParams(
                dimension_semantics=("parallel",),
                vmem_limit_bytes=self.vmem_limit),
        )(x3, self.w1_flat, self.w2_jw)

        # y[b, k, (o,m)] -> [b, o, k, m].
        # TODO(synk): this final permute costs one extra HBM pass; it is only taken on
        # the large-shape fallback path (the composed path stores NCHW directly).
        return y.reshape(B, K, self.nch_out, self.ncol).transpose(0, 2, 1, 3)


def generalised_ift2(x, w1, w2, *, nl=None, **kwargs):
    """One-shot convenience wrapper (prefer GeneralisedIFT2 to cache the operators)."""
    return GeneralisedIFT2(w1, w2, nl=nl, **kwargs)(x)


# --------------------------------------------------------------------------
# Parameter init (matches init_fourier_, kernel_size=1) and pure-JAX reference
# --------------------------------------------------------------------------

def fourier_weight(N):
    """Replicates init_fourier_ (ortho) for kernel_size=1, trailing kernel dim squeezed.

    Returns weight of shape (2*N, 2, N): [out_channel, in_channel(real/imag), row]."""
    k = jnp.arange(N, dtype=jnp.float32)[:, None]
    n = jnp.arange(N, dtype=jnp.float32)[None, :]
    ang = 2.0 * jnp.pi * k * n / N
    c, s = jnp.cos(ang), jnp.sin(ang)
    top = jnp.stack([c, -s], axis=1)   # output channels 0..N-1
    bot = jnp.stack([s, c], axis=1)    # output channels N..2N-1
    return (jnp.concatenate([top, bot], axis=0) / jnp.sqrt(jnp.float32(N))).astype(jnp.float32)


def reference_forward(x, w1, w2, nl=None):
    """Pure-JAX (f32) reference matching the PyTorch forward (kernel_size=1, no bias/bn)."""
    B, nch_in, nrow, ncol = x.shape
    nch_int = w1.shape[0] // nrow
    nch_out = w2.shape[0] // ncol
    w1r = w1.reshape(nch_int, nrow, nch_in, nrow)
    t = jnp.einsum("jkcn,bcnw->bjkw", w1r, x)          # idft1 + reshape (+ permute absorbed)
    if nl == "tanh":
        t = jnp.tanh(t)
    elif nl == "relu":
        t = jnp.maximum(t, 0.0)
    elif nl == "sigmoid":
        t = jax.nn.sigmoid(t)
    elif nl is not None:
        raise ValueError(nl)
    w2r = w2.reshape(nch_out, ncol, nch_int, ncol)
    y = jnp.einsum("omjw,bjkw->bokm", w2r, t)          # idft2 + reshape + final permute
    return y


def _check(name, y, y_ref, tol=5e-2):
    # bf16 MXU operands with f32 accumulation: compare with a scale-aware tolerance.
    err = float(jnp.max(jnp.abs(y - y_ref)))
    scale = max(1.0, float(jnp.max(jnp.abs(y_ref))))
    assert err <= tol * scale, f"{name}: max abs err {err:.4f} > {tol * scale:.4f}"


if __name__ == "__main__":
    # nch_in == nch_int == nch_out == 2 is required by the Fourier init (init_fourier=True).
    B, nch, nrow, ncol = 16, 2, 16, 16

    key = jax.random.PRNGKey(0)
    x = jax.random.normal(key, (B, nch, nrow, ncol), dtype=jnp.float32)

    # Deterministic parameters: inverse Fourier transform init.
    w1 = fourier_weight(nrow)  # (2*nrow, 2, nrow)
    w2 = fourier_weight(ncol)  # (2*ncol, 2, ncol)

    # 1) Default linear config (nl=None): single composed-operator lane-dense matmul.
    layer_lin = GeneralisedIFT2(w1, w2, nl=None)
    y = jax.block_until_ready(layer_lin(x))
    y_ref = reference_forward(x, w1, w2, nl=None)
    assert y.shape == (B, nch, nrow, ncol)
    _check("composed nl=None", y, y_ref)

    # 2) Nonlinearity between transforms: two lane-dense expanded matmuls per tile.
    layer_tanh = GeneralisedIFT2(w1, w2, nl="tanh")
    y2 = jax.block_until_ready(layer_tanh(x))
    _check("expanded nl=tanh", y2, reference_forward(x, w1, w2, nl="tanh"))

    # 3/4) Factored fallback (what large nrow*ncol would use), forced here to verify it.
    layer_fac_t = GeneralisedIFT2(w1, w2, nl="tanh", composed=False)
    y3 = jax.block_until_ready(layer_fac_t(x))
    _check("factored nl=tanh", y3, reference_forward(x, w1, w2, nl="tanh"))

    layer_fac_l = GeneralisedIFT2(w1, w2, nl=None, composed=False)
    y4 = jax.block_until_ready(layer_fac_l(x))
    _check("factored nl=None", y4, y_ref)

    print("KERNEL_OK")
</pallas_src>

<mosaic_0001>
module attributes {stable_mosaic.version = 11 : i64} {
  func.func @_fused_kernel(%arg0: i32, %arg1: memref<8x512xbf16, #tpu.memory_space<vmem>>, %arg2: memref<512x512xbf16, #tpu.memory_space<vmem>>, %arg3: memref<8x512xf32, #tpu.memory_space<vmem>>) attributes {dimension_semantics = [#tpu.dimension_semantics<parallel>], iteration_bounds = array<i64: 2>, scalar_prefetch = 0 : i64, scratch_operands = 0 : i64, tpu.core_type = #tpu.core_type<tc>, window_params = [{transform_indices = @transform_0, window_bounds = array<i64: 8, 512>}, {pipeline_mode = #tpu.pipeline_mode<synchronous>, transform_indices = @transform_1, window_bounds = array<i64: 512, 512>}, {transform_indices = @transform_2, window_bounds = array<i64: 8, 512>}]} {
    %c0 = arith.constant 0 : index
    %c0_0 = arith.constant 0 : index
    %0 = vector.load %arg1[%c0, %c0_0] : memref<8x512xbf16, #tpu.memory_space<vmem>>, vector<8x512xbf16>
    %c0_1 = arith.constant 0 : index
    %c0_2 = arith.constant 0 : index
    %1 = vector.load %arg2[%c0_1, %c0_2] : memref<512x512xbf16, #tpu.memory_space<vmem>>, vector<512x512xbf16>
    %cst = arith.constant dense<0.000000e+00> : vector<8x512xf32>
    %2 = tpu.matmul %0, %1, %cst {dimension_numbers = #tpu.dot_dimension_numbers<[1], [0], [0], [1], [0, 0, 1, 1], [], []>} : vector<8x512xbf16>, vector<512x512xbf16>, vector<8x512xf32> -> vector<8x512xf32>
    %c0_3 = arith.constant 0 : index
    %c0_4 = arith.constant 0 : index
    %3 = vector.load %arg3[%c0_3, %c0_4] : memref<8x512xf32, #tpu.memory_space<vmem>>, vector<8x512xf32>
    tpu.vector_store %arg3[%c0_3, %c0_4], %2 {strides = array<i32>} : memref<8x512xf32, #tpu.memory_space<vmem>>, vector<8x512xf32>,
    return
  }
  func.func @transform_0(%arg0: i32) -> (i32, i32) {
    %c0_i32 = arith.constant 0 : i32
    %c0_i32_0 = arith.constant 0 : i32
    return %arg0, %c0_i32 : i32, i32
  }
  func.func @transform_1(%arg0: i32) -> (i32, i32) {
    %c0_i32 = arith.constant 0 : i32
    %c0_i32_0 = arith.constant 0 : i32
    %c0_i32_1 = arith.constant 0 : i32
    return %c0_i32, %c0_i32_0 : i32, i32
  }
  func.func @transform_2(%arg0: i32) -> (i32, i32) {
    %c0_i32 = arith.constant 0 : i32
    %c0_i32_0 = arith.constant 0 : i32
    return %arg0, %c0_i32 : i32, i32
  }
}

</mosaic_0001>

<llo_original>
// kernel: _forward_composed.1
$region0: #{_forward_composed.1}
  #allocation0 [shape = 'u32[]', space=smem, size = 0x4, offset = 0x4, fixed_abs, tag = 'smem constant byte address 0x4 - core index']
  #allocation1 [shape = 'u32[144,128]{1,0:T(1,128)}', space=vmem, size = 0x12000, scoped, tag = 'internal scratch']
  %s0 = inlined_call_operand.vmem [shape: bf16[16,512], index: 0, kind: input, shape index: {}]
  %s1 = inlined_call_operand.vmem [shape: bf16[512,512], index: 1, kind: input, shape index: {}]
  %s2 = inlined_call_operand.vmem [shape: f32[16,512], index: 2, kind: output, shape index: {}]
  %s3 = sld [smem:[#allocation0]]
  $region41: #{_forward_composed.1} parent=0
    _
  %s5 = ssub.s32 1, %s3
  %s6 = scalar_select 0, %s5, %s3
  loop: start=0, step=1, limit=4
  $region2: #{_forward_composed.1} parent=0 // loop_pre_header
    _
  $region3: #{_forward_composed.1} parent=0 // loop_header
    %s8 = sphi 0, %s12
    %p9 = scmp.ge.s32.totalorder %s8, 4
    %s18 = sphi 0, %s20
    %s21 = sphi 0, %s18
    %s22 = sphi 0, %s21
    %s38 = sphi 0, %s22
    %s42 = sphi 0, %s42
    %s44 = sphi 0, %s42
    %s45 = sphi 0, %s44
    %s59 = sphi 0, %s45
    %s65 = sphi 0, %s67
    %s68 = sphi 0, %s65
    %s69 = sphi 0, %s68
    %s85 = sphi 0, %s69
  $region4: #{_forward_composed.1} parent=0 // loop_header_branch
    %11 = sbr.rel (%p9) target = $region8
  $region5: #{_forward_composed.1} parent=0 // loop_body
    %s13 = ssub.s32 %s8, 1
    %s14 = ssub.s32 %s8, 2
    %s15 = sadd.s32 %s8, 1
    %s16 = ssub.s32 %s8, %s15
    %p17 = scmp.eq.s32.totalorder %s16, 0
    %s19 = sadd.s32 %s18, 1
    %s20 = scalar_select %p17, %s18, %s19
    %p23 = pneg %p17
    %p24 = scmp.eq.s32.totalorder %s8, 1
    %p25 = por %p23, %p24
    %p26 = scmp.ne.s32.totalorder %s18, %s21
    %p27 = scmp.eq.s32.totalorder %s8, 0
    %p28 = por %p26, %p27
    %p29 = scmp.ne.s32.totalorder %s18, %s21
    %p30 = scmp.eq.s32.totalorder %s13, 1
    %p31 = por %p29, %p30
    %p32 = scmp.ne.s32.totalorder %s21, %s22
    %p33 = scmp.eq.s32.totalorder %s13, 0
    %p34 = por %p32, %p33
    %p35 = scmp.ne.s32.totalorder %s21, %s22
    %p36 = scmp.eq.s32.totalorder %s14, 1
    %p37 = por %p35, %p36
    %p39 = scmp.ne.s32.totalorder %s22, %s38
    %p40 = scmp.eq.s32.totalorder %s14, 0
    %p41 = por %p39, %p40
    %s43 = sadd.s32 %s42, 1
    %p46 = scmp.eq.s32.totalorder %s8, 1
    %p47 = scmp.ne.s32.totalorder %s42, %s44
    %p48 = scmp.eq.s32.totalorder %s8, 0
    %p49 = por %p47, %p48
    %p50 = scmp.ne.s32.totalorder %s42, %s44
    %p51 = scmp.eq.s32.totalorder %s13, 1
    %p52 = por %p50, %p51
    %p53 = scmp.ne.s32.totalorder %s44, %s45
    %p54 = scmp.eq.s32.totalorder %s13, 0
    %p55 = por %p53, %p54
    %p56 = scmp.ne.s32.totalorder %s44, %s45
    %p57 = scmp.eq.s32.totalorder %s14, 1
    %p58 = por %p56, %p57
    %p60 = scmp.ne.s32.totalorder %s45, %s59
    %p61 = scmp.eq.s32.totalorder %s14, 0
    %p62 = por %p60, %p61
    %s63 = ssub.s32 %s8, %s15
    %p64 = scmp.eq.s32.totalorder %s63, 0
    %s66 = sadd.s32 %s65, 1
    %s67 = scalar_select %p64, %s65, %s66
    %p70 = pneg %p64
    %p71 = scmp.eq.s32.totalorder %s8, 1
    %p72 = por %p70, %p71
    %p73 = scmp.ne.s32.totalorder %s65, %s68
    %p74 = scmp.eq.s32.totalorder %s8, 0
    %p75 = por %p73, %p74
    %p76 = scmp.ne.s32.totalorder %s65, %s68
    %p77 = scmp.eq.s32.totalorder %s13, 1
    %p78 = por %p76, %p77
    %p79 = scmp.ne.s32.totalorder %s68, %s69
    %p80 = scmp.eq.s32.totalorder %s13, 0
    %p81 = por %p79, %p80
    %p82 = scmp.ne.s32.totalorder %s68, %s69
    %p83 = scmp.eq.s32.totalorder %s14, 1
    %p84 = por %p82, %p83
    %p86 = scmp.ne.s32.totalorder %s69, %s85
    %p87 = scmp.eq.s32.totalorder %s14, 0
    %p88 = por %p86, %p87
    %p89 = scmp.le.s32.totalorder 1, %s8
    %p90 = scmp.lt.s32.totalorder %s8, 3
    %p91 = pnand %p89, %p90
    %p92 = pneg %p91
    // Predicated region
    $region9: #{_forward_composed.1} parent=5 // pred_check
      _
    $region10: #{_forward_composed.1} parent=5 // pred_check_branch
      %94 = sbr.rel (%p91) target = $region12
    $region11: #{_forward_composed.1} parent=5 // pred_region
      %s95 = ssub.s32 %s8, 1
      // Predicated region
      $region13: #{_forward_composed.1} parent=11 // pred_check
        %p96 = pneg %p55
      $region14: #{_forward_composed.1} parent=11 // pred_check_branch
        %98 = sbr.rel (%p96) target = $region16
      $region15: #{_forward_composed.1} parent=11 // pred_region
        _
      $region16: #{_forward_composed.1} parent=11 // pred_fallthru
        _
    $region12: #{_forward_composed.1} parent=5 // pred_fallthru
      _
    %p99 = scmp.lt.s32.totalorder %s8, 2
    // Predicated region
    $region17: #{_forward_composed.1} parent=5 // pred_check
      %p100 = pneg %p99
    $region18: #{_forward_composed.1} parent=5 // pred_check_branch
      %102 = sbr.rel (%p100) target = $region20
    $region19: #{_forward_composed.1} parent=5 // pred_region
      // Predicated region
      $region21: #{_forward_composed.1} parent=19 // pred_check
        %p103 = pneg %p28
      $region22: #{_forward_composed.1} parent=19 // pred_check_branch
        %105 = sbr.rel (%p103) target = $region24
      $region23: #{_forward_composed.1} parent=19 // pred_region
        %p106 = scmp.lt.s32.totalorder %s8, 1
        %s107 = scalar_select %p106, %s8, 1
        %s108 = smul.addr %s107, 4
        %s109 = smul.addr %s108, 4
        %s110 = scalar_lea.vmem %s0, %s109
      $region24: #{_forward_composed.1} parent=19 // pred_fallthru
        _
    $region20: #{_forward_composed.1} parent=5 // pred_fallthru
      _
    %p111 = scmp.le.s32.totalorder 1, %s8
    %p112 = scmp.lt.s32.totalorder %s8, 3
    %p113 = pnand %p111, %p112
    %p114 = pneg %p113
    // Predicated region
    $region25: #{_forward_composed.1} parent=5 // pred_check
      _
    $region26: #{_forward_composed.1} parent=5 // pred_check_branch
      %116 = sbr.rel (%p113) target = $region28
    $region27: #{_forward_composed.1} parent=5 // pred_region
      %s117 = ssub.s32 %s8, 1
      %p118 = scmp.lt.s32.totalorder %s13, 1
      %s119 = scalar_select %p118, %s13, 1
      %s120 = smul.addr %s119, 4
      %s121 = smul.addr %s120, 4
      %s122 = scalar_lea.vmem %s0, %s121
      %p123 = pneg %p34
      %p124 = pneg %p31
      %p125 = pneg %p55
      %p126 = pneg %p52
      %p127 = pneg %p81
      %p128 = pneg %p78
      %p129 = scmp.lt.s32.totalorder %s13, 1
      %s130 = scalar_select %p129, %s13, 1
      %s131 = smul.addr %s130, 4
      %s132 = smul.addr %s131, 8
      %s133 = scalar_lea.vmem %s2, %s132
      %p134 = scmp.lt.s32.totalorder %s13, 1
      %s135 = scalar_select %p134, %s13, 1
      %s136 = smul.addr %s135, 4
      %s137 = smul.addr %s136, 4
      %s138 = scalar_lea.vmem %s0, %s137
      %p139 = scmp.lt.s32.totalorder %s13, 1
      %s140 = scalar_select %p139, %s13, 1
      %s141 = smul.addr %s140, 4
      %s142 = smul.addr %s141, 8
      %s143 = scalar_lea.vmem %s2, %s142
      %v144 = vld [vmem:[%s138] sm:$0xff]
      %v145 = vld [vmem:[%s138 + $0x8] sm:$0xff]
      %v146 = vld [vmem:[%s1] sm:$0xff]
      %v147 = vld [vmem:[%s1 + $0x8] sm:$0xff]
      %v148 = vld [vmem:[%s1 + $0x10] sm:$0xff]
      %v149 = vld [vmem:[%s1 + $0x18] sm:$0xff]
      %v150 = vld [vmem:[%s1 + $0x20] sm:$0xff]
      %v151 = vld [vmem:[%s1 + $0x28] sm:$0xff]
      %v152 = vld [vmem:[%s1 + $0x30] sm:$0xff]
      %v153 = vld [vmem:[%s1 + $0x38] sm:$0xff]
      %v154 = vld [vmem:[%s1 + $0x40] sm:$0xff]
      %v155 = vld [vmem:[%s1 + $0x48] sm:$0xff]
      %v156 = vld [vmem:[%s1 + $0x50] sm:$0xff]
      %v157 = vld [vmem:[%s1 + $0x58] sm:$0xff]
      %v158 = vld [vmem:[%s1 + $0x60] sm:$0xff]
      %v159 = vld [vmem:[%s1 + $0x68] sm:$0xff]
      %v160 = vld [vmem:[%s1 + $0x70] sm:$0xff]
      %v161 = vld [vmem:[%s1 + $0x78] sm:$0xff]
      %v162 = vld [vmem:[%s1 + $0x80] sm:$0xff]
      %v163 = vld [vmem:[%s1 + $0x88] sm:$0xff]
      %v164 = vld [vmem:[%s1 + $0x90] sm:$0xff]
      %v165 = vld [vmem:[%s1 + $0x98] sm:$0xff]
      %v166 = vld [vmem:[%s1 + $0xa0] sm:$0xff]
      %v167 = vld [vmem:[%s1 + $0xa8] sm:$0xff]
      %v168 = vld [vmem:[%s1 + $0xb0] sm:$0xff]
      %v169 = vld [vmem:[%s1 + $0xb8] sm:$0xff]
      %v170 = vld [vmem:[%s1 + $0xc0] sm:$0xff]
      %v171 = vld [vmem:[%s1 + $0xc8] sm:$0xff]
      %v172 = vld [vmem:[%s1 + $0xd0] sm:$0xff]
      %v173 = vld [vmem:[%s1 + $0xd8] sm:$0xff]
      %v174 = vld [vmem:[%s1 + $0xe0] sm:$0xff]
      %v175 = vld [vmem:[%s1 + $0xe8] sm:$0xff]
      %v176 = vld [vmem:[%s1 + $0xf0] sm:$0xff]
      %v177 = vld [vmem:[%s1 + $0xf8] sm:$0xff]
      %v178 = vld [vmem:[%s1 + $0x100] sm:$0xff]
      %v179 = vld [vmem:[%s1 + $0x108] sm:$0xff]
      %v180 = vld [vmem:[%s1 + $0x110] sm:$0xff]
      %v181 = vld [vmem:[%s1 + $0x118] sm:$0xff]
      %v182 = vld [vmem:[%s1 + $0x120] sm:$0xff]
      %v183 = vld [vmem:[%s1 + $0x128] sm:$0xff]
      %v184 = vld [vmem:[%s1 + $0x130] sm:$0xff]
      %v185 = vld [vmem:[%s1 + $0x138] sm:$0xff]
      %v186 = vld [vmem:[%s1 + $0x140] sm:$0xff]
      %v187 = vld [vmem:[%s1 + $0x148] sm:$0xff]
      %v188 = vld [vmem:[%s1 + $0x150] sm:$0xff]
      %v189 = vld [vmem:[%s1 + $0x158] sm:$0xff]
      %v190 = vld [vmem:[%s1 + $0x160] sm:$0xff]
      %v191 = vld [vmem:[%s1 + $0x168] sm:$0xff]
      %v192 = vld [vmem:[%s1 + $0x170] sm:$0xff]
      %v193 = vld [vmem:[%s1 + $0x178] sm:$0xff]
      %v194 = vld [vmem:[%s1 + $0x180] sm:$0xff]
      %v195 = vld [vmem:[%s1 + $0x188] sm:$0xff]
      %v196 = vld [vmem:[%s1 + $0x190] sm:$0xff]
      %v197 = vld [vmem:[%s1 + $0x198] sm:$0xff]
      %v198 = vld [vmem:[%s1 + $0x1a0] sm:$0xff]
      %v199 = vld [vmem:[%s1 + $0x1a8] sm:$0xff]
      %v200 = vld [vmem:[%s1 + $0x1b0] sm:$0xff]
      %v201 = vld [vmem:[%s1 + $0x1b8] sm:$0xff]
      %v202 = vld [vmem:[%s1 + $0x1c0] sm:$0xff]
      %v203 = vld [vmem:[%s1 + $0x1c8] sm:$0xff]
      %v204 = vld [vmem:[%s1 + $0x1d0] sm:$0xff]
      %v205 = vld [vmem:[%s1 + $0x1d8] sm:$0xff]
      %v206 = vld [vmem:[%s1 + $0x1e0] sm:$0xff]
      %v207 = vld [vmem:[%s1 + $0x1e8] sm:$0xff]
      %v208 = vld [vmem:[%s1 + $0x1f0] sm:$0xff]
      %v209 = vld [vmem:[%s1 + $0x1f8] sm:$0xff]
      %v210 = vld [vmem:[%s1 + $0x200] sm:$0xff]
      %v211 = vld [vmem:[%s1 + $0x208] sm:$0xff]
      %v212 = vld [vmem:[%s1 + $0x210] sm:$0xff]
      %v213 = vld [vmem:[%s1 + $0x218] sm:$0xff]
      %v214 = vld [vmem:[%s1 + $0x220] sm:$0xff]
      %v215 = vld [vmem:[%s1 + $0x228] sm:$0xff]
      %v216 = vld [vmem:[%s1 + $0x230] sm:$0xff]
      %v217 = vld [vmem:[%s1 + $0x238] sm:$0xff]
      %v218 = vld [vmem:[%s1 + $0x240] sm:$0xff]
      %v219 = vld [vmem:[%s1 + $0x248] sm:$0xff]
      %v220 = vld [vmem:[%s1 + $0x250] sm:$0xff]
      %v221 = vld [vmem:[%s1 + $0x258] sm:$0xff]
      %v222 = vld [vmem:[%s1 + $0x260] sm:$0xff]
      %v223 = vld [vmem:[%s1 + $0x268] sm:$0xff]
      %v224 = vld [vmem:[%s1 + $0x270] sm:$0xff]
      %v225 = vld [vmem:[%s1 + $0x278] sm:$0xff]
      %v226 = vld [vmem:[%s1 + $0x280] sm:$0xff]
      %v227 = vld [vmem:[%s1 + $0x288] sm:$0xff]
      %v228 = vld [vmem:[%s1 + $0x290] sm:$0xff]
      %v229 = vld [vmem:[%s1 + $0x298] sm:$0xff]
      %v230 = vld [vmem:[%s1 + $0x2a0] sm:$0xff]
      %v231 = vld [vmem:[%s1 + $0x2a8] sm:$0xff]
      %v232 = vld [vmem:[%s1 + $0x2b0] sm:$0xff]
      %v233 = vld [vmem:[%s1 + $0x2b8] sm:$0xff]
      %v234 = vld [vmem:[%s1 + $0x2c0] sm:$0xff]
      %v235 = vld [vmem:[%s1 + $0x2c8] sm:$0xff]
      %v236 = vld [vmem:[%s1 + $0x2d0] sm:$0xff]
      %v237 = vld [vmem:[%s1 + $0x2d8] sm:$0xff]
      %v238 = vld [vmem:[%s1 + $0x2e0] sm:$0xff]
      %v239 = vld [vmem:[%s1 + $0x2e8] sm:$0xff]
      %v240 = vld [vmem:[%s1 + $0x2f0] sm:$0xff]
      %v241 = vld [vmem:[%s1 + $0x2f8] sm:$0xff]
      %v242 = vld [vmem:[%s1 + $0x300] sm:$0xff]
      %v243 = vld [vmem:[%s1 + $0x308] sm:$0xff]
      %v244 = vld [vmem:[%s1 + $0x310] sm:$0xff]
      %v245 = vld [vmem:[%s1 + $0x318] sm:$0xff]
      %v246 = vld [vmem:[%s1 + $0x320] sm:$0xff]
      %v247 = vld [vmem:[%s1 + $0x328] sm:$0xff]
      %v248 = vld [vmem:[%s1 + $0x330] sm:$0xff]
      %v249 = vld [vmem:[%s1 + $0x338] sm:$0xff]
      %v250 = vld [vmem:[%s1 + $0x340] sm:$0xff]
      %v251 = vld [vmem:[%s1 + $0x348] sm:$0xff]
      %v252 = vld [vmem:[%s1 + $0x350] sm:$0xff]
      %v253 = vld [vmem:[%s1 + $0x358] sm:$0xff]
      %v254 = vld [vmem:[%s1 + $0x360] sm:$0xff]
      %v255 = vld [vmem:[%s1 + $0x368] sm:$0xff]
      %v256 = vld [vmem:[%s1 + $0x370] sm:$0xff]
      %v257 = vld [vmem:[%s1 + $0x378] sm:$0xff]
      %v258 = vld [vmem:[%s1 + $0x380] sm:$0xff]
      %v259 = vld [vmem:[%s1 + $0x388] sm:$0xff]
      %v260 = vld [vmem:[%s1 + $0x390] sm:$0xff]
      %v261 = vld [vmem:[%s1 + $0x398] sm:$0xff]
      %v262 = vld [vmem:[%s1 + $0x3a0] sm:$0xff]
      %v263 = vld [vmem:[%s1 + $0x3a8] sm:$0xff]
      %v264 = vld [vmem:[%s1 + $0x3b0] sm:$0xff]
      %v265 = vld [vmem:[%s1 + $0x3b8] sm:$0xff]
      %v266 = vld [vmem:[%s1 + $0x3c0] sm:$0xff]
      %v267 = vld [vmem:[%s1 + $0x3c8] sm:$0xff]
      %v268 = vld [vmem:[%s1 + $0x3d0] sm:$0xff]
      %v269 = vld [vmem:[%s1 + $0x3d8] sm:$0xff]
      %v270 = vld [vmem:[%s1 + $0x3e0] sm:$0xff]
      %v271 = vld [vmem:[%s1 + $0x3e8] sm:$0xff]
      %v272 = vld [vmem:[%s1 + $0x3f0] sm:$0xff]
      %v273 = vld [vmem:[%s1 + $0x3f8] sm:$0xff]
      %v276 = vunpack.c.l.b16 %v144
      %v277 = vunpack.c.h.b16 %v144
      %v278 = vunpack.c.l.b16 %v145
      %v279 = vunpack.c.h.b16 %v145
      %v280 = vpack.c.b16 %v276, %v276
      %v281 = vpack.c.b16 %v277, %v277
      %v282 = vpack.c.b16 %v278, %v278
      %v283 = vpack.c.b16 %v279, %v279
      %v416 = vunpack.c.l.b16 %v146
      %v417 = vunpack.c.h.b16 %v146
      %v418 = vunpack.c.l.b16 %v147
      %v419 = vunpack.c.h.b16 %v147
      %v420 = vunpack.c.l.b16 %v148
      %v421 = vunpack.c.h.b16 %v148
      %v422 = vunpack.c.l.b16 %v149
      %v423 = vunpack.c.h.b16 %v149
      %v424 = vunpack.c.l.b16 %v150
      %v425 = vunpack.c.h.b16 %v150
      %v426 = vunpack.c.l.b16 %v151
      %v427 = vunpack.c.h.b16 %v151
      %v428 = vunpack.c.l.b16 %v152
      %v429 = vunpack.c.h.b16 %v152
      %v430 = vunpack.c.l.b16 %v153
      %v431 = vunpack.c.h.b16 %v153
      %v432 = vunpack.c.l.b16 %v154
      %v433 = vunpack.c.h.b16 %v154
      %v434 = vunpack.c.l.b16 %v155
      %v435 = vunpack.c.h.b16 %v155
      %v436 = vunpack.c.l.b16 %v156
      %v437 = vunpack.c.h.b16 %v156
      %v438 = vunpack.c.l.b16 %v157
      %v439 = vunpack.c.h.b16 %v157
      %v440 = vunpack.c.l.b16 %v158
      %v441 = vunpack.c.h.b16 %v158
      %v442 = vunpack.c.l.b16 %v159
      %v443 = vunpack.c.h.b16 %v159
      %v444 = vunpack.c.l.b16 %v160
      %v445 = vunpack.c.h.b16 %v160
      %v446 = vunpack.c.l.b16 %v161
      %v447 = vunpack.c.h.b16 %v161
      %v448 = vunpack.c.l.b16 %v162
      %v449 = vunpack.c.h.b16 %v162
      %v450 = vunpack.c.l.b16 %v163
      %v451 = vunpack.c.h.b16 %v163
      %v452 = vunpack.c.l.b16 %v164
      %v453 = vunpack.c.h.b16 %v164
      %v454 = vunpack.c.l.b16 %v165
      %v455 = vunpack.c.h.b16 %v165
      %v456 = vunpack.c.l.b16 %v166
      %v457 = vunpack.c.h.b16 %v166
      %v458 = vunpack.c.l.b16 %v167
      %v459 = vunpack.c.h.b16 %v167
      %v460 = vunpack.c.l.b16 %v168
      %v461 = vunpack.c.h.b16 %v168
      %v462 = vunpack.c.l.b16 %v169
      %v463 = vunpack.c.h.b16 %v169
      %v464 = vunpack.c.l.b16 %v170
      %v465 = vunpack.c.h.b16 %v170
      %v466 = vunpack.c.l.b16 %v171
      %v467 = vunpack.c.h.b16 %v171
      %v468 = vunpack.c.l.b16 %v172
      %v469 = vunpack.c.h.b16 %v172
      %v470 = vunpack.c.l.b16 %v173
      %v471 = vunpack.c.h.b16 %v173
      %v472 = vunpack.c.l.b16 %v174
      %v473 = vunpack.c.h.b16 %v174
      %v474 = vunpack.c.l.b16 %v175
      %v475 = vunpack.c.h.b16 %v175
      %v476 = vunpack.c.l.b16 %v176
      %v477 = vunpack.c.h.b16 %v176
      %v478 = vunpack.c.l.b16 %v177
      %v479 = vunpack.c.h.b16 %v177
      %v480 = vunpack.c.l.b16 %v178
      %v481 = vunpack.c.h.b16 %v178
      %v482 = vunpack.c.l.b16 %v179
      %v483 = vunpack.c.h.b16 %v179
      %v484 = vunpack.c.l.b16 %v180
      %v485 = vunpack.c.h.b16 %v180
      %v486 = vunpack.c.l.b16 %v181
      %v487 = vunpack.c.h.b16 %v181
      %v488 = vunpack.c.l.b16 %v182
      %v489 = vunpack.c.h.b16 %v182
      %v490 = vunpack.c.l.b16 %v183
      %v491 = vunpack.c.h.b16 %v183
      %v492 = vunpack.c.l.b16 %v184
      %v493 = vunpack.c.h.b16 %v184
      %v494 = vunpack.c.l.b16 %v185
      %v495 = vunpack.c.h.b16 %v185
      %v496 = vunpack.c.l.b16 %v186
      %v497 = vunpack.c.h.b16 %v186
      %v498 = vunpack.c.l.b16 %v187
      %v499 = vunpack.c.h.b16 %v187
      %v500 = vunpack.c.l.b16 %v188
      %v501 = vunpack.c.h.b16 %v188
      %v502 = vunpack.c.l.b16 %v189
      %v503 = vunpack.c.h.b16 %v189
      %v504 = vunpack.c.l.b16 %v190
      %v505 = vunpack.c.h.b16 %v190
      %v506 = vunpack.c.l.b16 %v191
      %v507 = vunpack.c.h.b16 %v191
      %v508 = vunpack.c.l.b16 %v192
      %v509 = vunpack.c.h.b16 %v192
      %v510 = vunpack.c.l.b16 %v193
      %v511 = vunpack.c.h.b16 %v193
      %v512 = vunpack.c.l.b16 %v194
      %v513 = vunpack.c.h.b16 %v194
      %v514 = vunpack.c.l.b16 %v195
      %v515 = vunpack.c.h.b16 %v195
      %v516 = vunpack.c.l.b16 %v196
      %v517 = vunpack.c.h.b16 %v196
      %v518 = vunpack.c.l.b16 %v197
      %v519 = vunpack.c.h.b16 %v197
      %v520 = vunpack.c.l.b16 %v198
      %v521 = vunpack.c.h.b16 %v198
      %v522 = vunpack.c.l.b16 %v199
      %v523 = vunpack.c.h.b16 %v199
      %v524 = vunpack.c.l.b16 %v200
      %v525 = vunpack.c.h.b16 %v200
      %v526 = vunpack.c.l.b16 %v201
      %v527 = vunpack.c.h.b16 %v201
      %v528 = vunpack.c.l.b16 %v202
      %v529 = vunpack.c.h.b16 %v202
      %v530 = vunpack.c.l.b16 %v203
      %v531 = vunpack.c.h.b16 %v203
      %v532 = vunpack.c.l.b16 %v204
      %v533 = vunpack.c.h.b16 %v204
      %v534 = vunpack.c.l.b16 %v205
      %v535 = vunpack.c.h.b16 %v205
      %v536 = vunpack.c.l.b16 %v206
      %v537 = vunpack.c.h.b16 %v206
      %v538 = vunpack.c.l.b16 %v207
      %v539 = vunpack.c.h.b16 %v207
      %v540 = vunpack.c.l.b16 %v208
      %v541 = vunpack.c.h.b16 %v208
      %v542 = vunpack.c.l.b16 %v209
      %v543 = vunpack.c.h.b16 %v209
      %v544 = vunpack.c.l.b16 %v210
      %v545 = vunpack.c.h.b16 %v210
      %v546 = vunpack.c.l.b16 %v211
      %v547 = vunpack.c.h.b16 %v211
      %v548 = vunpack.c.l.b16 %v212
      %v549 = vunpack.c.h.b16 %v212
      %v550 = vunpack.c.l.b16 %v213
      %v551 = vunpack.c.h.b16 %v213
      %v552 = vunpack.c.l.b16 %v214
      %v553 = vunpack.c.h.b16 %v214
      %v554 = vunpack.c.l.b16 %v215
      %v555 = vunpack.c.h.b16 %v215
      %v556 = vunpack.c.l.b16 %v216
      %v557 = vunpack.c.h.b16 %v216
      %v558 = vunpack.c.l.b16 %v217
      %v559 = vunpack.c.h.b16 %v217
      %v560 = vunpack.c.l.b16 %v218
      %v561 = vunpack.c.h.b16 %v218
      %v562 = vunpack.c.l.b16 %v219
      %v563 = vunpack.c.h.b16 %v219
      %v564 = vunpack.c.l.b16 %v220
      %v565 = vunpack.c.h.b16 %v220
      %v566 = vunpack.c.l.b16 %v221
      %v567 = vunpack.c.h.b16 %v221
      %v568 = vunpack.c.l.b16 %v222
      %v569 = vunpack.c.h.b16 %v222
      %v570 = vunpack.c.l.b16 %v223
      %v571 = vunpack.c.h.b16 %v223
      %v572 = vunpack.c.l.b16 %v224
      %v573 = vunpack.c.h.b16 %v224
      %v574 = vunpack.c.l.b16 %v225
      %v575 = vunpack.c.h.b16 %v225
      %v576 = vunpack.c.l.b16 %v226
      %v577 = vunpack.c.h.b16 %v226
      %v578 = vunpack.c.l.b16 %v227
      %v579 = vunpack.c.h.b16 %v227
      %v580 = vunpack.c.l.b16 %v228
      %v581 = vunpack.c.h.b16 %v228
      %v582 = vunpack.c.l.b16 %v229
      %v583 = vunpack.c.h.b16 %v229
      %v584 = vunpack.c.l.b16 %v230
      %v585 = vunpack.c.h.b16 %v230
      %v586 = vunpack.c.l.b16 %v231
      %v587 = vunpack.c.h.b16 %v231
      %v588 = vunpack.c.l.b16 %v232
      %v589 = vunpack.c.h.b16 %v232
      %v590 = vunpack.c.l.b16 %v233
      %v591 = vunpack.c.h.b16 %v233
      %v592 = vunpack.c.l.b16 %v234
      %v593 = vunpack.c.h.b16 %v234
      %v594 = vunpack.c.l.b16 %v235
      %v595 = vunpack.c.h.b16 %v235
      %v596 = vunpack.c.l.b16 %v236
      %v597 = vunpack.c.h.b16 %v236
      %v598 = vunpack.c.l.b16 %v237
      %v599 = vunpack.c.h.b16 %v237
      %v600 = vunpack.c.l.b16 %v238
      %v601 = vunpack.c.h.b16 %v238
      %v602 = vunpack.c.l.b16 %v239
      %v603 = vunpack.c.h.b16 %v239
      %v604 = vunpack.c.l.b16 %v240
      %v605 = vunpack.c.h.b16 %v240
      %v606 = vunpack.c.l.b16 %v241
      %v607 = vunpack.c.h.b16 %v241
      %v608 = vunpack.c.l.b16 %v242
      %v609 = vunpack.c.h.b16 %v242
      %v610 = vunpack.c.l.b16 %v243
      %v611 = vunpack.c.h.b16 %v243
      %v612 = vunpack.c.l.b16 %v244
      %v613 = vunpack.c.h.b16 %v244
      %v614 = vunpack.c.l.b16 %v245
      %v615 = vunpack.c.h.b16 %v245
      %v616 = vunpack.c.l.b16 %v246
      %v617 = vunpack.c.h.b16 %v246
      %v618 = vunpack.c.l.b16 %v247
      %v619 = vunpack.c.h.b16 %v247
      %v620 = vunpack.c.l.b16 %v248
      %v621 = vunpack.c.h.b16 %v248
      %v622 = vunpack.c.l.b16 %v249
      %v623 = vunpack.c.h.b16 %v249
      %v624 = vunpack.c.l.b16 %v250
      %v625 = vunpack.c.h.b16 %v250
      %v626 = vunpack.c.l.b16 %v251
      %v627 = vunpack.c.h.b16 %v251
      %v628 = vunpack.c.l.b16 %v252
      %v629 = vunpack.c.h.b16 %v252
      %v630 = vunpack.c.l.b16 %v253
      %v631 = vunpack.c.h.b16 %v253
      %v632 = vunpack.c.l.b16 %v254
      %v633 = vunpack.c.h.b16 %v254
      %v634 = vunpack.c.l.b16 %v255
      %v635 = vunpack.c.h.b16 %v255
      %v636 = vunpack.c.l.b16 %v256
      %v637 = vunpack.c.h.b16 %v256
      %v638 = vunpack.c.l.b16 %v257
      %v639 = vunpack.c.h.b16 %v257
      %v640 = vunpack.c.l.b16 %v258
      %v641 = vunpack.c.h.b16 %v258
      %v642 = vunpack.c.l.b16 %v259
      %v643 = vunpack.c.h.b16 %v259
      %v644 = vunpack.c.l.b16 %v260
      %v645 = vunpack.c.h.b16 %v260
      %v646 = vunpack.c.l.b16 %v261
      %v647 = vunpack.c.h.b16 %v261
      %v648 = vunpack.c.l.b16 %v262
      %v649 = vunpack.c.h.b16 %v262
      %v650 = vunpack.c.l.b16 %v263
      %v651 = vunpack.c.h.b16 %v263
      %v652 = vunpack.c.l.b16 %v264
      %v653 = vunpack.c.h.b16 %v264
      %v654 = vunpack.c.l.b16 %v265
      %v655 = vunpack.c.h.b16 %v265
      %v656 = vunpack.c.l.b16 %v266
      %v657 = vunpack.c.h.b16 %v266
      %v658 = vunpack.c.l.b16 %v267
      %v659 = vunpack.c.h.b16 %v267
      %v660 = vunpack.c.l.b16 %v268
      %v661 = vunpack.c.h.b16 %v268
      %v662 = vunpack.c.l.b16 %v269
      %v663 = vunpack.c.h.b16 %v269
      %v664 = vunpack.c.l.b16 %v270
      %v665 = vunpack.c.h.b16 %v270
      %v666 = vunpack.c.l.b16 %v271
      %v667 = vunpack.c.h.b16 %v271
      %v668 = vunpack.c.l.b16 %v272
      %v669 = vunpack.c.h.b16 %v272
      %v670 = vunpack.c.l.b16 %v273
      %v671 = vunpack.c.h.b16 %v273
      %v672 = vpack.c.b16 %v420, %v416
      %v673 = vpack.c.b16 %v421, %v417
      %v674 = vpack.c.b16 %v422, %v418
      %v675 = vpack.c.b16 %v423, %v419
      %v676 = vpack.c.b16 %v428, %v424
      %v677 = vpack.c.b16 %v429, %v425
      %v678 = vpack.c.b16 %v430, %v426
      %v679 = vpack.c.b16 %v431, %v427
      %v680 = vpack.c.b16 %v436, %v432
      %v681 = vpack.c.b16 %v437, %v433
      %v682 = vpack.c.b16 %v438, %v434
      %v683 = vpack.c.b16 %v439, %v435
      %v684 = vpack.c.b16 %v444, %v440
      %v685 = vpack.c.b16 %v445, %v441
      %v686 = vpack.c.b16 %v446, %v442
      %v687 = vpack.c.b16 %v447, %v443
      %v688 = vpack.c.b16 %v452, %v448
      %v689 = vpack.c.b16 %v453, %v449
      %v690 = vpack.c.b16 %v454, %v450
      %v691 = vpack.c.b16 %v455, %v451
      %v692 = vpack.c.b16 %v460, %v456
      %v693 = vpack.c.b16 %v461, %v457
      %v694 = vpack.c.b16 %v462, %v458
      %v695 = vpack.c.b16 %v463, %v459
      %v696 = vpack.c.b16 %v468, %v464
      %v697 = vpack.c.b16 %v469, %v465
      %v698 = vpack.c.b16 %v470, %v466
      %v699 = vpack.c.b16 %v471, %v467
      %v700 = vpack.c.b16 %v476, %v472
      %v701 = vpack.c.b16 %v477, %v473
      %v702 = vpack.c.b16 %v478, %v474
      %v703 = vpack.c.b16 %v479, %v475
      %v704 = vpack.c.b16 %v484, %v480
      %v705 = vpack.c.b16 %v485, %v481
      %v706 = vpack.c.b16 %v486, %v482
      %v707 = vpack.c.b16 %v487, %v483
      %v708 = vpack.c.b16 %v492, %v488
      %v709 = vpack.c.b16 %v493, %v489
      %v710 = vpack.c.b16 %v494, %v490
      %v711 = vpack.c.b16 %v495, %v491
      %v712 = vpack.c.b16 %v500, %v496
      %v713 = vpack.c.b16 %v501, %v497
      %v714 = vpack.c.b16 %v502, %v498
      %v715 = vpack.c.b16 %v503, %v499
      %v716 = vpack.c.b16 %v508, %v504
      %v717 = vpack.c.b16 %v509, %v505
      %v718 = vpack.c.b16 %v510, %v506
      %v719 = vpack.c.b16 %v511, %v507
      %v720 = vpack.c.b16 %v516, %v512
      %v721 = vpack.c.b16 %v517, %v513
      %v722 = vpack.c.b16 %v518, %v514
      %v723 = vpack.c.b16 %v519, %v515
      %v724 = vpack.c.b16 %v524, %v520
      %v725 = vpack.c.b16 %v525, %v521
      %v726 = vpack.c.b16 %v526, %v522
      %v727 = vpack.c.b16 %v527, %v523
      %v728 = vpack.c.b16 %v532, %v528
      %v729 = vpack.c.b16 %v533, %v529
      %v730 = vpack.c.b16 %v534, %v530
      %v731 = vpack.c.b16 %v535, %v531
      %v732 = vpack.c.b16 %v540, %v536
      %v733 = vpack.c.b16 %v541, %v537
      %v734 = vpack.c.b16 %v542, %v538
      %v735 = vpack.c.b16 %v543, %v539
      %v736 = vpack.c.b16 %v548, %v544
      %v737 = vpack.c.b16 %v549, %v545
      %v738 = vpack.c.b16 %v550, %v546
      %v739 = vpack.c.b16 %v551, %v547
      %v740 = vpack.c.b16 %v556, %v552
      %v741 = vpack.c.b16 %v557, %v553
      %v742 = vpack.c.b16 %v558, %v554
      %v743 = vpack.c.b16 %v559, %v555
      %v744 = vpack.c.b16 %v564, %v560
      %v745 = vpack.c.b16 %v565, %v561
      %v746 = vpack.c.b16 %v566, %v562
      %v747 = vpack.c.b16 %v567, %v563
      %v748 = vpack.c.b16 %v572, %v568
      %v749 = vpack.c.b16 %v573, %v569
      %v750 = vpack.c.b16 %v574, %v570
      %v751 = vpack.c.b16 %v575, %v571
      %v752 = vpack.c.b16 %v580, %v576
      %v753 = vpack.c.b16 %v581, %v577
      %v754 = vpack.c.b16 %v582, %v578
      %v755 = vpack.c.b16 %v583, %v579
      %v756 = vpack.c.b16 %v588, %v584
      %v757 = vpack.c.b16 %v589, %v585
      %v758 = vpack.c.b16 %v590, %v586
      %v759 = vpack.c.b16 %v591, %v587
      %v760 = vpack.c.b16 %v596, %v592
      %v761 = vpack.c.b16 %v597, %v593
      %v762 = vpack.c.b16 %v598, %v594
      %v763 = vpack.c.b16 %v599, %v595
      %v764 = vpack.c.b16 %v604, %v600
      %v765 = vpack.c.b16 %v605, %v601
      %v766 = vpack.c.b16 %v606, %v602
      %v767 = vpack.c.b16 %v607, %v603
      %v768 = vpack.c.b16 %v612, %v608
      %v769 = vpack.c.b16 %v613, %v609
      %v770 = vpack.c.b16 %v614, %v610
      %v771 = vpack.c.b16 %v615, %v611
      %v772 = vpack.c.b16 %v620, %v616
      %v773 = vpack.c.b16 %v621, %v617
      %v774 = vpack.c.b16 %v622, %v618
      %v775 = vpack.c.b16 %v623, %v619
      %v776 = vpack.c.b16 %v628, %v624
      %v777 = vpack.c.b16 %v629, %v625
      %v778 = vpack.c.b16 %v630, %v626
      %v779 = vpack.c.b16 %v631, %v627
      %v780 = vpack.c.b16 %v636, %v632
      %v781 = vpack.c.b16 %v637, %v633
      %v782 = vpack.c.b16 %v638, %v634
      %v783 = vpack.c.b16 %v639, %v635
      %v784 = vpack.c.b16 %v644, %v640
      %v785 = vpack.c.b16 %v645, %v641
      %v786 = vpack.c.b16 %v646, %v642
      %v787 = vpack.c.b16 %v647, %v643
      %v788 = vpack.c.b16 %v652, %v648
      %v789 = vpack.c.b16 %v653, %v649
      %v790 = vpack.c.b16 %v654, %v650
      %v791 = vpack.c.b16 %v655, %v651
      %v792 = vpack.c.b16 %v660, %v656
      %v793 = vpack.c.b16 %v661, %v657
      %v794 = vpack.c.b16 %v662, %v658
      %v795 = vpack.c.b16 %v663, %v659
      %v796 = vpack.c.b16 %v668, %v664
      %v797 = vpack.c.b16 %v669, %v665
      %v798 = vpack.c.b16 %v670, %v666
      %v799 = vpack.c.b16 %v671, %v667
      %928 = vmatprep.subr.bf16.mxu0 %v673
      %929 = vmatpush1.bf16.msra.mxu0 %v672
      %930 = vmatprep.subr.bf16.mxu0 %v677
      %931 = vmatpush1.bf16.msra.mxu0 %v676
      %932 = vmatprep.subr.bf16.mxu0 %v681
      %933 = vmatpush1.bf16.msra.mxu0 %v680
      %934 = vmatprep.subr.bf16.mxu0 %v685
      %935 = vmatpush1.bf16.msra.mxu0 %v684
      %936 = vmatprep.subr.bf16.mxu0 %v689
      %937 = vmatpush1.bf16.msra.mxu0 %v688
      %938 = vmatprep.subr.bf16.mxu0 %v693
      %939 = vmatpush1.bf16.msra.mxu0 %v692
      %940 = vmatprep.subr.bf16.mxu0 %v697
      %941 = vmatpush1.bf16.msra.mxu0 %v696
      %942 = vmatprep.subr.bf16.mxu0 %v701
      %943 = vmatpush1.bf16.msra.mxu0 %v700
      %944 = vmatprep.subr.bf16.mxu0 %v705
      %945 = vmatpush1.bf16.msra.mxu0 %v704
      %946 = vmatprep.subr.bf16.mxu0 %v709
      %947 = vmatpush1.bf16.msra.mxu0 %v708
      %948 = vmatprep.subr.bf16.mxu0 %v713
      %949 = vmatpush1.bf16.msra.mxu0 %v712
      %950 = vmatprep.subr.bf16.mxu0 %v717
      %951 = vmatpush1.bf16.msra.mxu0 %v716
      %952 = vmatprep.subr.bf16.mxu0 %v721
      %953 = vmatpush1.bf16.msra.mxu0 %v720
      %954 = vmatprep.subr.bf16.mxu0 %v725
      %955 = vmatpush1.bf16.msra.mxu0 %v724
      %956 = vmatprep.subr.bf16.mxu0 %v729
      %957 = vmatpush1.bf16.msra.mxu0 %v728
      %958 = vmatprep.subr.bf16.mxu0 %v733
      %959 = vmatpush1.bf16.msra.mxu0 %v732
      %960 = vmatprep.mubr.bf16.mxu0 %v281
      %961 = vmatmul.mubr.bf16.gmra.mrb[0].mxu0 %v280
      %v962 = vpop.f32.mrb[0].mxu0
      %v963 = vadd.f32 0.0, %v962
      %v964 = vpop.f32.mrb[0].mxu0
      %v965 = vadd.f32 0.0, %v964
      %v966 = vpop.f32.mrb[0].mxu0
      %v967 = vpop.f32.mrb[0].mxu0
      %968 = vdwg.mxu0
      %969 = vmatprep.subr.bf16.mxu0 %v737
      %970 = vmatpush1.bf16.msra.mxu0 %v736
      %971 = vmatprep.subr.bf16.mxu0 %v741
      %972 = vmatpush1.bf16.msra.mxu0 %v740
      %973 = vmatprep.subr.bf16.mxu0 %v745
      %974 = vmatpush1.bf16.msra.mxu0 %v744
      %975 = vmatprep.subr.bf16.mxu0 %v749
      %976 = vmatpush1.bf16.msra.mxu0 %v748
      %977 = vmatprep.subr.bf16.mxu0 %v753
      %978 = vmatpush1.bf16.msra.mxu0 %v752
      %979 = vmatprep.subr.bf16.mxu0 %v757
      %980 = vmatpush1.bf16.msra.mxu0 %v756
      %981 = vmatprep.subr.bf16.mxu0 %v761
      %982 = vmatpush1.bf16.msra.mxu0 %v760
      %983 = vmatprep.subr.bf16.mxu0 %v765
      %984 = vmatpush1.bf16.msra.mxu0 %v764
      %985 = vmatprep.subr.bf16.mxu0 %v769
      %986 = vmatpush1.bf16.msra.mxu0 %v768
      %987 = vmatprep.subr.bf16.mxu0 %v773
      %988 = vmatpush1.bf16.msra.mxu0 %v772
      %989 = vmatprep.subr.bf16.mxu0 %v777
      %990 = vmatpush1.bf16.msra.mxu0 %v776
      %991 = vmatprep.subr.bf16.mxu0 %v781
      %992 = vmatpush1.bf16.msra.mxu0 %v780
      %993 = vmatprep.subr.bf16.mxu0 %v785
      %994 = vmatpush1.bf16.msra.mxu0 %v784
      %995 = vmatprep.subr.bf16.mxu0 %v789
      %996 = vmatpush1.bf16.msra.mxu0 %v788
      %997 = vmatprep.subr.bf16.mxu0 %v793
      %998 = vmatpush1.bf16.msra.mxu0 %v792
      %999 = vmatprep.subr.bf16.mxu0 %v797
      %1000 = vmatpush1.bf16.msra.mxu0 %v796
      %1001 = vmatprep.mubr.bf16.mxu0 %v283
      %1002 = vmatmul.mubr.bf16.gmra.mrb[0].mxu0 %v282
      %v1003 = vpop.f32.mrb[0].mxu0
      %v1004 = vadd.f32 %v963, %v1003
      %v1005 = vpop.f32.mrb[0].mxu0
      %v1006 = vadd.f32 %v965, %v1005
      %v1007 = vpop.f32.mrb[0].mxu0
      %v1008 = vpop.f32.mrb[0].mxu0
      %1009 = vdwg.mxu0
      %1010 = vmatprep.subr.bf16.mxu0 %v675
      %1011 = vmatpush1.bf16.msra.mxu0 %v674
      %1012 = vmatprep.subr.bf16.mxu0 %v679
      %1013 = vmatpush1.bf16.msra.mxu0 %v678
      %1014 = vmatprep.subr.bf16.mxu0 %v683
      %1015 = vmatpush1.bf16.msra.mxu0 %v682
      %1016 = vmatprep.subr.bf16.mxu0 %v687
      %1017 = vmatpush1.bf16.msra.mxu0 %v686
      %1018 = vmatprep.subr.bf16.mxu0 %v691
      %1019 = vmatpush1.bf16.msra.mxu0 %v690
      %1020 = vmatprep.subr.bf16.mxu0 %v695
      %1021 = vmatpush1.bf16.msra.mxu0 %v694
      %1022 = vmatprep.subr.bf16.mxu0 %v699
      %1023 = vmatpush1.bf16.msra.mxu0 %v698
      %1024 = vmatprep.subr.bf16.mxu0 %v703
      %1025 = vmatpush1.bf16.msra.mxu0 %v702
      %1026 = vmatprep.subr.bf16.mxu0 %v707
      %1027 = vmatpush1.bf16.msra.mxu0 %v706
      %1028 = vmatprep.subr.bf16.mxu0 %v711
      %1029 = vmatpush1.bf16.msra.mxu0 %v710
      %1030 = vmatprep.subr.bf16.mxu0 %v715
      %1031 = vmatpush1.bf16.msra.mxu0 %v714
      %1032 = vmatprep.subr.bf16.mxu0 %v719
      %1033 = vmatpush1.bf16.msra.mxu0 %v718
      %1034 = vmatprep.subr.bf16.mxu0 %v723
      %1035 = vmatpush1.bf16.msra.mxu0 %v722
      %1036 = vmatprep.subr.bf16.mxu0 %v727
      %1037 = vmatpush1.bf16.msra.mxu0 %v726
      %1038 = vmatprep.subr.bf16.mxu0 %v731
      %1039 = vmatpush1.bf16.msra.mxu0 %v730
      %1040 = vmatprep.subr.bf16.mxu0 %v735
      %1041 = vmatpush1.bf16.msra.mxu0 %v734
      %1042 = vmatprep.mubr.bf16.mxu0 %v281
      %1043 = vmatmul.mubr.bf16.gmra.mrb[0].mxu0 %v280
      %v1044 = vpop.f32.mrb[0].mxu0
      %v1045 = vadd.f32 0.0, %v1044
      %v1046 = vpop.f32.mrb[0].mxu0
      %v1047 = vadd.f32 0.0, %v1046
      %v1048 = vpop.f32.mrb[0].mxu0
      %v1049 = vpop.f32.mrb[0].mxu0
      %1050 = vdwg.mxu0
      %1051 = vmatprep.subr.bf16.mxu0 %v739
      %1052 = vmatpush1.bf16.msra.mxu0 %v738
      %1053 = vmatprep.subr.bf16.mxu0 %v743
      %1054 = vmatpush1.bf16.msra.mxu0 %v742
      %1055 = vmatprep.subr.bf16.mxu0 %v747
      %1056 = vmatpush1.bf16.msra.mxu0 %v746
      %1057 = vmatprep.subr.bf16.mxu0 %v751
      %1058 = vmatpush1.bf16.msra.mxu0 %v750
      %1059 = vmatprep.subr.bf16.mxu0 %v755
      %1060 = vmatpush1.bf16.msra.mxu0 %v754
      %1061 = vmatprep.subr.bf16.mxu0 %v759
      %1062 = vmatpush1.bf16.msra.mxu0 %v758
      %1063 = vmatprep.subr.bf16.mxu0 %v763
      %1064 = vmatpush1.bf16.msra.mxu0 %v762
      %1065 = vmatprep.subr.bf16.mxu0 %v767
      %1066 = vmatpush1.bf16.msra.mxu0 %v766
      %1067 = vmatprep.subr.bf16.mxu0 %v771
      %1068 = vmatpush1.bf16.msra.mxu0 %v770
      %1069 = vmatprep.subr.bf16.mxu0 %v775
      %1070 = vmatpush1.bf16.msra.mxu0 %v774
      %1071 = vmatprep.subr.bf16.mxu0 %v779
      %1072 = vmatpush1.bf16.msra.mxu0 %v778
      %1073 = vmatprep.subr.bf16.mxu0 %v783
      %1074 = vmatpush1.bf16.msra.mxu0 %v782
      %1075 = vmatprep.subr.bf16.mxu0 %v787
      %1076 = vmatpush1.bf16.msra.mxu0 %v786
      %1077 = vmatprep.subr.bf16.mxu0 %v791
      %1078 = vmatpush1.bf16.msra.mxu0 %v790
      %1079 = vmatprep.subr.bf16.mxu0 %v795
      %1080 = vmatpush1.bf16.msra.mxu0 %v794
      %1081 = vmatprep.subr.bf16.mxu0 %v799
      %1082 = vmatpush1.bf16.msra.mxu0 %v798
      %1083 = vmatprep.mubr.bf16.mxu0 %v283
      %1084 = vmatmul.mubr.bf16.gmra.mrb[0].mxu0 %v282
      %v1085 = vpop.f32.mrb[0].mxu0
      %v1086 = vadd.f32 %v1045, %v1085
      %v1087 = vpop.f32.mrb[0].mxu0
      %v1088 = vadd.f32 %v1047, %v1087
      %v1089 = vpop.f32.mrb[0].mxu0
      %v1090 = vpop.f32.mrb[0].mxu0
      %1091 = vdwg.mxu0
      %1092 = vst [vmem:[%s143] sm:$0xff] %v1004
      %1093 = vst [vmem:[%s143 + $0x8] sm:$0xff] %v1006
      %1094 = vst [vmem:[%s143 + $0x10] sm:$0xff] %v1086
      %1095 = vst [vmem:[%s143 + $0x18] sm:$0xff] %v1088
      %p1096 = scmp.lt.s32.totalorder %s13, 1
      %s1097 = scalar_select %p1096, %s13, 1
      %s1098 = smul.addr %s1097, 4
      %s1099 = smul.addr %s1098, 8
      %s1100 = scalar_lea.vmem %s2, %s1099
      // Predicated region
      $region29: #{_forward_composed.1} parent=27 // pred_check
        %p1101 = pneg %p78
      $region30: #{_forward_composed.1} parent=27 // pred_check_branch
        %1103 = sbr.rel (%p1101) target = $region32
      $region31: #{_forward_composed.1} parent=27 // pred_region
        _
      $region32: #{_forward_composed.1} parent=27 // pred_fallthru
        _
    $region28: #{_forward_composed.1} parent=5 // pred_fallthru
      _
    %p1104 = scmp.le.s32.totalorder 2, %s8
    // Predicated region
    $region33: #{_forward_composed.1} parent=5 // pred_check
      %p1105 = pneg %p1104
    $region34: #{_forward_composed.1} parent=5 // pred_check_branch
      %1107 = sbr.rel (%p1105) target = $region36
    $region35: #{_forward_composed.1} parent=5 // pred_region
      %s1108 = ssub.s32 %s8, 2
      // Predicated region
      $region37: #{_forward_composed.1} parent=35 // pred_check
        %p1109 = pneg %p84
      $region38: #{_forward_composed.1} parent=35 // pred_check_branch
        %1111 = sbr.rel (%p1109) target = $region40
      $region39: #{_forward_composed.1} parent=35 // pred_region
        %p1112 = scmp.lt.s32.totalorder %s14, 1
        %s1113 = scalar_select %p1112, %s14, 1
        %s1114 = smul.addr %s1113, 4
        %s1115 = smul.addr %s1114, 8
        %s1116 = scalar_lea.vmem %s2, %s1115
      $region40: #{_forward_composed.1} parent=35 // pred_fallthru
        _
    $region36: #{_forward_composed.1} parent=5 // pred_fallthru
      _
  $region6: #{_forward_composed.1} parent=0 // loop_footer
    %s12 = sadd.s32 1, %s8
  $region7: #{_forward_composed.1} parent=0 // loop_footer_branch
    %7 = sbr.rel target = $region3
  $region8: #{_forward_composed.1} parent=0 // loop_exit
    _

</llo_original>
